<compile_context>
chip_gen: v5e
topology: v5e:2x2
jax: 0.10.0
libtpu: 0.0.40
codegen_flags: <defaults>
</compile_context>

<pallas_src>
import jax
import jax.numpy as jnp
from jax import lax
from jax.experimental import pallas as pl
from jax.experimental.pallas import tpu as pltpu

LN_EPS = 1e-5
LEAKY_SLOPE = 0.01


def _layernorm(h, gamma, beta):
    mu = jnp.mean(h, axis=-1, keepdims=True)
    var = jnp.mean((h - mu) * (h - mu), axis=-1, keepdims=True)
    return (h - mu) * lax.rsqrt(var + LN_EPS) * gamma + beta


def _leaky_relu(h):
    return jnp.where(h > 0, h, LEAKY_SLOPE * h)


def critic_kernel(x_ref,
                  w1_ref, b1_ref, g1_ref, be1_ref,
                  w2_ref, b2_ref, g2_ref, be2_ref,
                  w3t_ref, b3_ref,
                  o_ref):
    # Layer 1: Linear (bf16 operands, f32 accumulate) -> LayerNorm -> LeakyReLU
    x = x_ref[...].astype(jnp.bfloat16)
    w1 = w1_ref[...].astype(jnp.bfloat16)
    h1 = jnp.dot(x, w1, preferred_element_type=jnp.float32) + b1_ref[...]
    h1 = _leaky_relu(_layernorm(h1, g1_ref[...], be1_ref[...]))

    # Layer 2: Linear (bf16 operands, f32 accumulate) -> LayerNorm -> LeakyReLU
    w2 = w2_ref[...].astype(jnp.bfloat16)
    h2 = jnp.dot(h1.astype(jnp.bfloat16), w2,
                 preferred_element_type=jnp.float32) + b2_ref[...]
    h2 = _leaky_relu(_layernorm(h2, g2_ref[...], be2_ref[...]))

    # Output head Linear(128, 1): VPU multiply + XLU lane reduction instead of
    # an N=1 MXU matmul (f32 throughout).
    out = jnp.sum(h2 * w3t_ref[...], axis=-1, keepdims=True) + b3_ref[...]
    o_ref[...] = out.astype(o_ref.dtype)


def _round_up(v, m):
    return (v + m - 1) // m * m


def ppo_critic_forward(x, params, *, tile_b=256):
    B, D_in = x.shape
    (w1, b1, g1, be1, w2, b2, g2, be2, w3, b3) = params

    H1, H2 = w1.shape[1], w2.shape[1]          # 256, 128
    D_out = w3.shape[1]                        # 1
    w3t = w3.T                                 # (1, H2) row for the VPU head

    # Effective batch tile: multiple of 8 (f32 sublane), no larger than the
    # (padded) batch, and capped so the double-buffered x tile stays <= 16 MiB
    # even for large D_in (important on v7x's 64 MiB VMEM).
    tile_b_eff = min(tile_b, _round_up(B, 8))
    max_x_tile_bytes = 8 * 1024 * 1024
    while tile_b_eff > 8 and tile_b_eff * D_in * 4 > max_x_tile_bytes:
        tile_b_eff //= 2
    tile_b_eff = max(8, (tile_b_eff // 8) * 8)

    # Pad the batch instead of asserting divisibility.
    B_pad = _round_up(B, tile_b_eff)
    if B_pad != B:
        x = jnp.pad(x, ((0, B_pad - B), (0, 0)))

    # Rough VMEM need: double-buffered x / out tiles + weights + generous
    # allowance for activation temporaries (f32 + bf16 copies).
    est = 4 * (2 * tile_b_eff * D_in + 2 * tile_b_eff * D_out
               + D_in * H1 + H1 * H2 + H2 * D_out
               + 8 * (H1 + H2)
               + 6 * tile_b_eff * (H1 + H2))
    vmem_limit = int(min(max(2 * est, 32 * 1024 * 1024), 48 * 1024 * 1024))

    full = lambda shape: pl.BlockSpec(shape, lambda i: (0, 0))

    out = pl.pallas_call(
        critic_kernel,
        out_shape=jax.ShapeDtypeStruct((B_pad, D_out), jnp.float32),
        grid=(B_pad // tile_b_eff,),
        in_specs=[
            pl.BlockSpec((tile_b_eff, D_in), lambda i: (i, 0)),   # x tile
            full((D_in, H1)), full((1, H1)), full((1, H1)), full((1, H1)),
            full((H1, H2)),  full((1, H2)), full((1, H2)), full((1, H2)),
            full((1, H2)),   full((1, D_out)),
        ],
        out_specs=pl.BlockSpec((tile_b_eff, D_out), lambda i: (i, 0)),
        compiler_params=pltpu.CompilerParams(
            dimension_semantics=("parallel",),
            vmem_limit_bytes=vmem_limit),
    )(x, w1, b1, g1, be1, w2, b2, g2, be2, w3t, b3)

    return out[:B]


def init_params(key, input_size):
    """Deterministic synthetic parameters (shapes match the nn.Module)."""
    ks = jax.random.split(key, 6)
    H1, H2 = 256, 128

    def lin(kw, kb, fan_in, fan_out):
        bound = 1.0 / jnp.sqrt(fan_in)
        w = jax.random.uniform(kw, (fan_in, fan_out), jnp.float32, -bound, bound)
        b = jax.random.uniform(kb, (1, fan_out), jnp.float32, -bound, bound)
        return w, b

    w1, b1 = lin(ks[0], ks[1], input_size, H1)
    w2, b2 = lin(ks[2], ks[3], H1, H2)
    w3, b3 = lin(ks[4], ks[5], H2, 1)
    # LayerNorm affine params (PyTorch default init: gamma=1, beta=0)
    g1, be1 = jnp.ones((1, H1), jnp.float32), jnp.zeros((1, H1), jnp.float32)
    g2, be2 = jnp.ones((1, H2), jnp.float32), jnp.zeros((1, H2), jnp.float32)
    return (w1, b1, g1, be1, w2, b2, g2, be2, w3, b3)


def reference_forward(x, params):
    """Pure-JAX f32 reference matching the PyTorch module."""
    (w1, b1, g1, be1, w2, b2, g2, be2, w3, b3) = params
    h = x @ w1 + b1
    h = _leaky_relu(_layernorm(h, g1, be1))
    h = h @ w2 + b2
    h = _leaky_relu(_layernorm(h, g2, be2))
    return h @ w3 + b3


if __name__ == "__main__":
    key = jax.random.PRNGKey(0)
    k_x, k_p = jax.random.split(key)

    # batch deliberately not a multiple of the tile to exercise the padding path.
    batch, input_size = 12, 32
    x = jax.random.normal(k_x, (batch, input_size), jnp.float32)
    params = init_params(k_p, input_size)

    out = jax.block_until_ready(ppo_critic_forward(x, params))

    ref = reference_forward(x, params)
    assert out.shape == (batch, 1)
    # bf16 matmul operands (f32 accumulate) => slightly looser tolerance vs f32 ref.
    assert jnp.allclose(out, ref, atol=5e-2, rtol=5e-2), (out, ref)

    print("KERNEL_OK")
</pallas_src>

<mosaic_0001>
module attributes {stable_mosaic.version = 11 : i64} {
  func.func @critic_kernel(%arg0: i32, %arg1: memref<16x32xf32, #tpu.memory_space<vmem>>, %arg2: memref<32x256xf32, #tpu.memory_space<vmem>>, %arg3: memref<1x256xf32, #tpu.memory_space<vmem>>, %arg4: memref<1x256xf32, #tpu.memory_space<vmem>>, %arg5: memref<1x256xf32, #tpu.memory_space<vmem>>, %arg6: memref<256x128xf32, #tpu.memory_space<vmem>>, %arg7: memref<1x128xf32, #tpu.memory_space<vmem>>, %arg8: memref<1x128xf32, #tpu.memory_space<vmem>>, %arg9: memref<1x128xf32, #tpu.memory_space<vmem>>, %arg10: memref<1x128xf32, #tpu.memory_space<vmem>>, %arg11: memref<1x1xf32, #tpu.memory_space<vmem>>, %arg12: memref<16x1xf32, #tpu.memory_space<vmem>>) attributes {dimension_semantics = [#tpu.dimension_semantics<parallel>], iteration_bounds = array<i64: 1>, scalar_prefetch = 0 : i64, scratch_operands = 0 : i64, tpu.core_type = #tpu.core_type<tc>, window_params = [{transform_indices = @transform_0, window_bounds = array<i64: 16, 32>}, {pipeline_mode = #tpu.pipeline_mode<synchronous>, transform_indices = @transform_1, window_bounds = array<i64: 32, 256>}, {pipeline_mode = #tpu.pipeline_mode<synchronous>, transform_indices = @transform_2, window_bounds = array<i64: 1, 256>}, {pipeline_mode = #tpu.pipeline_mode<synchronous>, transform_indices = @transform_3, window_bounds = array<i64: 1, 256>}, {pipeline_mode = #tpu.pipeline_mode<synchronous>, transform_indices = @transform_4, window_bounds = array<i64: 1, 256>}, {pipeline_mode = #tpu.pipeline_mode<synchronous>, transform_indices = @transform_5, window_bounds = array<i64: 256, 128>}, {pipeline_mode = #tpu.pipeline_mode<synchronous>, transform_indices = @transform_6, window_bounds = array<i64: 1, 128>}, {pipeline_mode = #tpu.pipeline_mode<synchronous>, transform_indices = @transform_7, window_bounds = array<i64: 1, 128>}, {pipeline_mode = #tpu.pipeline_mode<synchronous>, transform_indices = @transform_8, window_bounds = array<i64: 1, 128>}, {pipeline_mode = #tpu.pipeline_mode<synchronous>, transform_indices = @transform_9, window_bounds = array<i64: 1, 128>}, {pipeline_mode = #tpu.pipeline_mode<synchronous>, transform_indices = @transform_10, window_bounds = array<i64: 1, 1>}, {transform_indices = @transform_11, window_bounds = array<i64: 16, 1>}]} {
    %c0 = arith.constant 0 : index
    %c0_0 = arith.constant 0 : index
    %0 = vector.load %arg1[%c0, %c0_0] : memref<16x32xf32, #tpu.memory_space<vmem>>, vector<16x32xf32>
    %1 = arith.truncf %0 : vector<16x32xf32> to vector<16x32xbf16>
    %c0_1 = arith.constant 0 : index
    %c0_2 = arith.constant 0 : index
    %2 = vector.load %arg2[%c0_1, %c0_2] : memref<32x256xf32, #tpu.memory_space<vmem>>, vector<32x256xf32>
    %3 = arith.truncf %2 : vector<32x256xf32> to vector<32x256xbf16>
    %cst = arith.constant dense<0.000000e+00> : vector<16x256xf32>
    %4 = tpu.matmul %1, %3, %cst {dimension_numbers = #tpu.dot_dimension_numbers<[1], [0], [0], [1], [0, 0, 1, 1], [], []>} : vector<16x32xbf16>, vector<32x256xbf16>, vector<16x256xf32> -> vector<16x256xf32>
    %c0_3 = arith.constant 0 : index
    %c0_4 = arith.constant 0 : index
    %5 = vector.load %arg3[%c0_3, %c0_4] : memref<1x256xf32, #tpu.memory_space<vmem>>, vector<1x256xf32>
    %6 = vector.broadcast %5 : vector<1x256xf32> to vector<16x256xf32>
    %7 = arith.addf %4, %6 : vector<16x256xf32>
    %c0_5 = arith.constant 0 : index
    %c0_6 = arith.constant 0 : index
    %8 = vector.load %arg4[%c0_5, %c0_6] : memref<1x256xf32, #tpu.memory_space<vmem>>, vector<1x256xf32>
    %c0_7 = arith.constant 0 : index
    %c0_8 = arith.constant 0 : index
    %9 = vector.load %arg5[%c0_7, %c0_8] : memref<1x256xf32, #tpu.memory_space<vmem>>, vector<1x256xf32>
    %cst_9 = arith.constant dense<0.000000e+00> : vector<16xf32>
    %10 = vector.multi_reduction <add>, %7, %cst_9 [1] : vector<16x256xf32> to vector<16xf32>
    %11 = vector.shape_cast %10 : vector<16xf32> to vector<16x1xf32>
    %cst_10 = arith.constant 2.560000e+02 : f32
    %12 = vector.broadcast %cst_10 : f32 to vector<16x1xf32>
    %13 = arith.divf %11, %12 : vector<16x1xf32>
    %14 = vector.broadcast %13 : vector<16x1xf32> to vector<16x256xf32>
    %15 = arith.subf %7, %14 : vector<16x256xf32>
    %16 = vector.broadcast %13 : vector<16x1xf32> to vector<16x256xf32>
    %17 = arith.subf %7, %16 : vector<16x256xf32>
    %18 = arith.mulf %15, %17 : vector<16x256xf32>
    %cst_11 = arith.constant dense<0.000000e+00> : vector<16xf32>
    %19 = vector.multi_reduction <add>, %18, %cst_11 [1] : vector<16x256xf32> to vector<16xf32>
    %20 = vector.shape_cast %19 : vector<16xf32> to vector<16x1xf32>
    %cst_12 = arith.constant 2.560000e+02 : f32
    %21 = vector.broadcast %cst_12 : f32 to vector<16x1xf32>
    %22 = arith.divf %20, %21 : vector<16x1xf32>
    %23 = vector.broadcast %13 : vector<16x1xf32> to vector<16x256xf32>
    %24 = arith.subf %7, %23 : vector<16x256xf32>
    %cst_13 = arith.constant 9.99999974E-6 : f32
    %25 = vector.broadcast %cst_13 : f32 to vector<16x1xf32>
    %26 = arith.addf %22, %25 : vector<16x1xf32>
    %27 = math.rsqrt %26 : vector<16x1xf32>
    %28 = vector.broadcast %27 : vector<16x1xf32> to vector<16x256xf32>
    %29 = arith.mulf %24, %28 : vector<16x256xf32>
    %30 = vector.broadcast %8 : vector<1x256xf32> to vector<16x256xf32>
    %31 = arith.mulf %29, %30 : vector<16x256xf32>
    %32 = vector.broadcast %9 : vector<1x256xf32> to vector<16x256xf32>
    %33 = arith.addf %31, %32 : vector<16x256xf32>
    %cst_14 = arith.constant 0.000000e+00 : f32
    %34 = vector.broadcast %cst_14 : f32 to vector<16x256xf32>
    %35 = arith.cmpf ogt, %33, %34 : vector<16x256xf32>
    %cst_15 = arith.constant 0.00999999977 : f32
    %36 = vector.broadcast %cst_15 : f32 to vector<16x256xf32>
    %37 = arith.mulf %36, %33 : vector<16x256xf32>
    %38 = arith.select %35, %33, %37 : vector<16x256xi1>, vector<16x256xf32>
    %c0_16 = arith.constant 0 : index
    %c0_17 = arith.constant 0 : index
    %39 = vector.load %arg6[%c0_16, %c0_17] : memref<256x128xf32, #tpu.memory_space<vmem>>, vector<256x128xf32>
    %40 = arith.truncf %39 : vector<256x128xf32> to vector<256x128xbf16>
    %41 = arith.truncf %38 : vector<16x256xf32> to vector<16x256xbf16>
    %cst_18 = arith.constant dense<0.000000e+00> : vector<16x128xf32>
    %42 = tpu.matmul %41, %40, %cst_18 {dimension_numbers = #tpu.dot_dimension_numbers<[1], [0], [0], [1], [0, 0, 1, 1], [], []>} : vector<16x256xbf16>, vector<256x128xbf16>, vector<16x128xf32> -> vector<16x128xf32>
    %c0_19 = arith.constant 0 : index
    %c0_20 = arith.constant 0 : index
    %43 = vector.load %arg7[%c0_19, %c0_20] : memref<1x128xf32, #tpu.memory_space<vmem>>, vector<1x128xf32>
    %44 = vector.broadcast %43 : vector<1x128xf32> to vector<16x128xf32>
    %45 = arith.addf %42, %44 : vector<16x128xf32>
    %c0_21 = arith.constant 0 : index
    %c0_22 = arith.constant 0 : index
    %46 = vector.load %arg8[%c0_21, %c0_22] : memref<1x128xf32, #tpu.memory_space<vmem>>, vector<1x128xf32>
    %c0_23 = arith.constant 0 : index
    %c0_24 = arith.constant 0 : index
    %47 = vector.load %arg9[%c0_23, %c0_24] : memref<1x128xf32, #tpu.memory_space<vmem>>, vector<1x128xf32>
    %cst_25 = arith.constant dense<0.000000e+00> : vector<16xf32>
    %48 = vector.multi_reduction <add>, %45, %cst_25 [1] : vector<16x128xf32> to vector<16xf32>
    %49 = vector.shape_cast %48 : vector<16xf32> to vector<16x1xf32>
    %cst_26 = arith.constant 1.280000e+02 : f32
    %50 = vector.broadcast %cst_26 : f32 to vector<16x1xf32>
    %51 = arith.divf %49, %50 : vector<16x1xf32>
    %52 = vector.broadcast %51 : vector<16x1xf32> to vector<16x128xf32>
    %53 = arith.subf %45, %52 : vector<16x128xf32>
    %54 = vector.broadcast %51 : vector<16x1xf32> to vector<16x128xf32>
    %55 = arith.subf %45, %54 : vector<16x128xf32>
    %56 = arith.mulf %53, %55 : vector<16x128xf32>
    %cst_27 = arith.constant dense<0.000000e+00> : vector<16xf32>
    %57 = vector.multi_reduction <add>, %56, %cst_27 [1] : vector<16x128xf32> to vector<16xf32>
    %58 = vector.shape_cast %57 : vector<16xf32> to vector<16x1xf32>
    %cst_28 = arith.constant 1.280000e+02 : f32
    %59 = vector.broadcast %cst_28 : f32 to vector<16x1xf32>
    %60 = arith.divf %58, %59 : vector<16x1xf32>
    %61 = vector.broadcast %51 : vector<16x1xf32> to vector<16x128xf32>
    %62 = arith.subf %45, %61 : vector<16x128xf32>
    %cst_29 = arith.constant 9.99999974E-6 : f32
    %63 = vector.broadcast %cst_29 : f32 to vector<16x1xf32>
    %64 = arith.addf %60, %63 : vector<16x1xf32>
    %65 = math.rsqrt %64 : vector<16x1xf32>
    %66 = vector.broadcast %65 : vector<16x1xf32> to vector<16x128xf32>
    %67 = arith.mulf %62, %66 : vector<16x128xf32>
    %68 = vector.broadcast %46 : vector<1x128xf32> to vector<16x128xf32>
    %69 = arith.mulf %67, %68 : vector<16x128xf32>
    %70 = vector.broadcast %47 : vector<1x128xf32> to vector<16x128xf32>
    %71 = arith.addf %69, %70 : vector<16x128xf32>
    %cst_30 = arith.constant 0.000000e+00 : f32
    %72 = vector.broadcast %cst_30 : f32 to vector<16x128xf32>
    %73 = arith.cmpf ogt, %71, %72 : vector<16x128xf32>
    %cst_31 = arith.constant 0.00999999977 : f32
    %74 = vector.broadcast %cst_31 : f32 to vector<16x128xf32>
    %75 = arith.mulf %74, %71 : vector<16x128xf32>
    %76 = arith.select %73, %71, %75 : vector<16x128xi1>, vector<16x128xf32>
    %c0_32 = arith.constant 0 : index
    %c0_33 = arith.constant 0 : index
    %77 = vector.load %arg10[%c0_32, %c0_33] : memref<1x128xf32, #tpu.memory_space<vmem>>, vector<1x128xf32>
    %78 = vector.broadcast %77 : vector<1x128xf32> to vector<16x128xf32>
    %79 = arith.mulf %76, %78 : vector<16x128xf32>
    %cst_34 = arith.constant dense<0.000000e+00> : vector<16xf32>
    %80 = vector.multi_reduction <add>, %79, %cst_34 [1] : vector<16x128xf32> to vector<16xf32>
    %81 = vector.shape_cast %80 : vector<16xf32> to vector<16x1xf32>
    %c0_35 = arith.constant 0 : index
    %c0_36 = arith.constant 0 : index
    %82 = vector.load %arg11[%c0_35, %c0_36] : memref<1x1xf32, #tpu.memory_space<vmem>>, vector<1x1xf32>
    %83 = vector.broadcast %82 : vector<1x1xf32> to vector<16x1xf32>
    %84 = arith.addf %81, %83 : vector<16x1xf32>
    %c0_37 = arith.constant 0 : index
    %c0_38 = arith.constant 0 : index
    %85 = vector.load %arg12[%c0_37, %c0_38] : memref<16x1xf32, #tpu.memory_space<vmem>>, vector<16x1xf32>
    tpu.vector_store %arg12[%c0_37, %c0_38], %84 {strides = array<i32>} : memref<16x1xf32, #tpu.memory_space<vmem>>, vector<16x1xf32>,
    return
  }
  func.func @transform_0(%arg0: i32) -> (i32, i32) {
    %c0_i32 = arith.constant 0 : i32
    %c0_i32_0 = arith.constant 0 : i32
    return %arg0, %c0_i32 : i32, i32
  }
  func.func @transform_1(%arg0: i32) -> (i32, i32) {
    %c0_i32 = arith.constant 0 : i32
    %c0_i32_0 = arith.constant 0 : i32
    %c0_i32_1 = arith.constant 0 : i32
    return %c0_i32, %c0_i32_0 : i32, i32
  }
  func.func @transform_2(%arg0: i32) -> (i32, i32) {
    %c0_i32 = arith.constant 0 : i32
    %c0_i32_0 = arith.constant 0 : i32
    %c0_i32_1 = arith.constant 0 : i32
    return %c0_i32, %c0_i32_0 : i32, i32
  }
  func.func @transform_3(%arg0: i32) -> (i32, i32) {
    %c0_i32 = arith.constant 0 : i32
    %c0_i32_0 = arith.constant 0 : i32
    %c0_i32_1 = arith.constant 0 : i32
    return %c0_i32, %c0_i32_0 : i32, i32
  }
  func.func @transform_4(%arg0: i32) -> (i32, i32) {
    %c0_i32 = arith.constant 0 : i32
    %c0_i32_0 = arith.constant 0 : i32
    %c0_i32_1 = arith.constant 0 : i32
    return %c0_i32, %c0_i32_0 : i32, i32
  }
  func.func @transform_5(%arg0: i32) -> (i32, i32) {
    %c0_i32 = arith.constant 0 : i32
    %c0_i32_0 = arith.constant 0 : i32
    %c0_i32_1 = arith.constant 0 : i32
    return %c0_i32, %c0_i32_0 : i32, i32
  }
  func.func @transform_6(%arg0: i32) -> (i32, i32) {
    %c0_i32 = arith.constant 0 : i32
    %c0_i32_0 = arith.constant 0 : i32
    %c0_i32_1 = arith.constant 0 : i32
    return %c0_i32, %c0_i32_0 : i32, i32
  }
  func.func @transform_7(%arg0: i32) -> (i32, i32) {
    %c0_i32 = arith.constant 0 : i32
    %c0_i32_0 = arith.constant 0 : i32
    %c0_i32_1 = arith.constant 0 : i32
    return %c0_i32, %c0_i32_0 : i32, i32
  }
  func.func @transform_8(%arg0: i32) -> (i32, i32) {
    %c0_i32 = arith.constant 0 : i32
    %c0_i32_0 = arith.constant 0 : i32
    %c0_i32_1 = arith.constant 0 : i32
    return %c0_i32, %c0_i32_0 : i32, i32
  }
  func.func @transform_9(%arg0: i32) -> (i32, i32) {
    %c0_i32 = arith.constant 0 : i32
    %c0_i32_0 = arith.constant 0 : i32
    %c0_i32_1 = arith.constant 0 : i32
    return %c0_i32, %c0_i32_0 : i32, i32
  }
  func.func @transform_10(%arg0: i32) -> (i32, i32) {
    %c0_i32 = arith.constant 0 : i32
    %c0_i32_0 = arith.constant 0 : i32
    %c0_i32_1 = arith.constant 0 : i32
    return %c0_i32, %c0_i32_0 : i32, i32
  }
  func.func @transform_11(%arg0: i32) -> (i32, i32) {
    %c0_i32 = arith.constant 0 : i32
    %c0_i32_0 = arith.constant 0 : i32
    return %arg0, %c0_i32 : i32, i32
  }
}

</mosaic_0001>

<llo_original>
// kernel: tpu_custom_call.1
$region0: #{tpu_custom_call.1}
  #allocation0 [shape = 'u32[]', space=smem, size = 0x4, offset = 0x4, fixed_abs, tag = 'smem constant byte address 0x4 - core index']
  #allocation1 [shape = 'u32[72,128]{1,0:T(1,128)}', space=vmem, size = 0x9000, scoped, tag = 'internal scratch']
  #allocation2 [shape = 'f32[1,1]{1,0:T(1,128)S(1)}', space=vmem, size = 0x200, scoped, tag = 'scoped memory for tpu_custom_call.1']
  %s0 = inlined_call_operand.hbm [shape: f32[16,32], index: 0, kind: input, shape index: {}]
  %s1 = inlined_call_operand.hbm [shape: f32[32,256], index: 1, kind: input, shape index: {}]
  %s2 = inlined_call_operand.vmem [shape: f32[1,256], index: 2, kind: input, shape index: {}]
  %s3 = inlined_call_operand.vmem [shape: f32[1,256], index: 3, kind: input, shape index: {}]
  %s4 = inlined_call_operand.hbm [shape: f32[1,256], index: 4, kind: input, shape index: {}]
  %s5 = inlined_call_operand.hbm [shape: f32[256,128], index: 5, kind: input, shape index: {}]
  %s6 = inlined_call_operand.vmem [shape: f32[1,128], index: 6, kind: input, shape index: {}]
  %s7 = inlined_call_operand.vmem [shape: f32[1,128], index: 7, kind: input, shape index: {}]
  %s8 = inlined_call_operand.vmem [shape: f32[1,128], index: 8, kind: input, shape index: {}]
  %s9 = inlined_call_operand.vmem [shape: f32[1,128], index: 9, kind: input, shape index: {}]
  %s10 = inlined_call_operand.<no memory space> [shape: f32[1,1], index: 10, kind: input, shape index: {}]
  %s11 = inlined_call_operand.vmem [shape: f32[16,1], index: 11, kind: output, shape index: {}]
  %s12 = sld [smem:[#allocation0]]
  $region70: #{tpu_custom_call.1} parent=0
    _
  %s14 = ssub.s32 1, %s12
  %s15 = scalar_select 0, %s14, %s12
  %v16 = vstv %s10
  %17 = vst [vmem:[#allocation2] sm:$0x1] %v16
  $region1: #{tpu_custom_call.1} parent=0
    #allocation3 [shape = 'u8[8192]{0}', space=vmem, size = 0x2000, scoped, tag = 'input window, operand 0, single buffered']
    #allocation4 [shape = 's32[1]{0}', space=sflag, size = 0x4, scoped, tag = 'scoped memory for tpu_custom_call.1']
    #allocation5 [shape = 'u8[32768]{0}', space=vmem, size = 0x8000, scoped, tag = 'input window, operand 1, single buffered']
    #allocation6 [shape = 's32[1]{0}', space=sflag, size = 0x4, scoped, tag = 'scoped memory for tpu_custom_call.1']
    #allocation7 [shape = 'u8[1024]{0}', space=vmem, size = 0x400, scoped, tag = 'input window, operand 4, single buffered']
    #allocation8 [shape = 'u8[131072]{0}', space=vmem, size = 0x20000, scoped, tag = 'input window, operand 5, single buffered']
    #allocation9 [shape = 's32[1]{0}', space=sflag, size = 0x4, scoped, tag = 'scoped memory for tpu_custom_call.1']
    %18 = vsyncpa [#allocation4], 0
    %19 = vsyncpa [#allocation6], 0
    %20 = vsyncpa [#allocation9], 0
    // Predicated region
    $region2: #{tpu_custom_call.1} parent=1 // pred_check
      _
    $region3: #{tpu_custom_call.1} parent=1 // pred_check_branch
      %22 = sbr.rel (0) target = $region5
    $region4: #{tpu_custom_call.1} parent=1 // pred_region
      %24 = vsyncadd [#allocation4], 0
      %s25 = sshll.u32 %s0, 4
      %s26 = int_to_ptr.hbm [resolvable:$true] %s25
      %s27 = sshll.u32 [#allocation3], 4
      %s28 = int_to_ptr.vmem [resolvable:$true] %s27
      %33 = dma.hbm_to_vmem [thread:$0]  %s26, 256, %s28, [#allocation4], 128, 128, 8
    $region5: #{tpu_custom_call.1} parent=1 // pred_fallthru
      _
    // Predicated region
    $region6: #{tpu_custom_call.1} parent=1 // pred_check
      _
    $region7: #{tpu_custom_call.1} parent=1 // pred_check_branch
      %35 = sbr.rel (0) target = $region9
    $region8: #{tpu_custom_call.1} parent=1 // pred_region
      %37 = vsyncadd [#allocation6], 0
      %s38 = sshll.u32 %s1, 4
      %s39 = int_to_ptr.hbm [resolvable:$true] %s38
      %s40 = sshll.u32 [#allocation5], 4
      %s41 = int_to_ptr.vmem [resolvable:$true] %s40
      %46 = dma.hbm_to_vmem [thread:$0]  %s39, 1024, %s41, [#allocation6], 256, 256, 16
    $region9: #{tpu_custom_call.1} parent=1 // pred_fallthru
      _
    // Predicated region
    $region10: #{tpu_custom_call.1} parent=1 // pred_check
      _
    $region11: #{tpu_custom_call.1} parent=1 // pred_check_branch
      %48 = sbr.rel (0) target = $region13
    $region12: #{tpu_custom_call.1} parent=1 // pred_region
      _
    $region13: #{tpu_custom_call.1} parent=1 // pred_fallthru
      _
    // Predicated region
    $region14: #{tpu_custom_call.1} parent=1 // pred_check
      _
    $region15: #{tpu_custom_call.1} parent=1 // pred_check_branch
      %50 = sbr.rel (0) target = $region17
    $region16: #{tpu_custom_call.1} parent=1 // pred_region
      _
    $region17: #{tpu_custom_call.1} parent=1 // pred_fallthru
      _
    // Predicated region
    $region18: #{tpu_custom_call.1} parent=1 // pred_check
      _
    $region19: #{tpu_custom_call.1} parent=1 // pred_check_branch
      %52 = sbr.rel (0) target = $region21
    $region20: #{tpu_custom_call.1} parent=1 // pred_region
      %54 = vsyncadd [#allocation6], 0
      %s56 = sshll.u32 %s4, 4
      %s57 = int_to_ptr.hbm [resolvable:$true] %s56
      %s58 = sshll.u32 [#allocation7], 4
      %s59 = int_to_ptr.vmem [resolvable:$true] %s58
      %61 = dma.hbm_to_vmem [thread:$0]  %s57, 32, %s59, [#allocation6]
    $region21: #{tpu_custom_call.1} parent=1 // pred_fallthru
      _
    // Predicated region
    $region22: #{tpu_custom_call.1} parent=1 // pred_check
      _
    $region23: #{tpu_custom_call.1} parent=1 // pred_check_branch
      %63 = sbr.rel (0) target = $region25
    $region24: #{tpu_custom_call.1} parent=1 // pred_region
      %65 = vsyncadd [#allocation9], 0
      %s66 = sshll.u32 %s5, 4
      %s67 = int_to_ptr.hbm [resolvable:$true] %s66
      %s68 = sshll.u32 [#allocation8], 4
      %s69 = int_to_ptr.vmem [resolvable:$true] %s68
      %74 = dma.hbm_to_vmem [thread:$0]  %s67, 4096, %s69, [#allocation9], 128, 128, 8
    $region25: #{tpu_custom_call.1} parent=1 // pred_fallthru
      _
    // Predicated region
    $region26: #{tpu_custom_call.1} parent=1 // pred_check
      _
    $region27: #{tpu_custom_call.1} parent=1 // pred_check_branch
      %76 = sbr.rel (0) target = $region29
    $region28: #{tpu_custom_call.1} parent=1 // pred_region
      _
    $region29: #{tpu_custom_call.1} parent=1 // pred_fallthru
      _
    // Predicated region
    $region30: #{tpu_custom_call.1} parent=1 // pred_check
      _
    $region31: #{tpu_custom_call.1} parent=1 // pred_check_branch
      %78 = sbr.rel (0) target = $region33
    $region32: #{tpu_custom_call.1} parent=1 // pred_region
      _
    $region33: #{tpu_custom_call.1} parent=1 // pred_fallthru
      _
    // Predicated region
    $region34: #{tpu_custom_call.1} parent=1 // pred_check
      _
    $region35: #{tpu_custom_call.1} parent=1 // pred_check_branch
      %80 = sbr.rel (0) target = $region37
    $region36: #{tpu_custom_call.1} parent=1 // pred_region
      _
    $region37: #{tpu_custom_call.1} parent=1 // pred_fallthru
      _
    // Predicated region
    $region38: #{tpu_custom_call.1} parent=1 // pred_check
      _
    $region39: #{tpu_custom_call.1} parent=1 // pred_check_branch
      %82 = sbr.rel (0) target = $region41
    $region40: #{tpu_custom_call.1} parent=1 // pred_region
      _
    $region41: #{tpu_custom_call.1} parent=1 // pred_fallthru
      _
    // Predicated region
    $region42: #{tpu_custom_call.1} parent=1 // pred_check
      _
    $region43: #{tpu_custom_call.1} parent=1 // pred_check_branch
      %84 = sbr.rel (0) target = $region45
    $region44: #{tpu_custom_call.1} parent=1 // pred_region
      _
    $region45: #{tpu_custom_call.1} parent=1 // pred_fallthru
      _
    // Predicated region
    $region46: #{tpu_custom_call.1} parent=1 // pred_check
      _
    $region47: #{tpu_custom_call.1} parent=1 // pred_check_branch
      %86 = sbr.rel (0) target = $region49
    $region48: #{tpu_custom_call.1} parent=1 // pred_region
      %88 = dma.done [#allocation4], 256
    $region49: #{tpu_custom_call.1} parent=1 // pred_fallthru
      _
    // Predicated region
    $region50: #{tpu_custom_call.1} parent=1 // pred_check
      _
    $region51: #{tpu_custom_call.1} parent=1 // pred_check_branch
      %90 = sbr.rel (0) target = $region53
    $region52: #{tpu_custom_call.1} parent=1 // pred_region
      %92 = dma.done [#allocation6], 1024
    $region53: #{tpu_custom_call.1} parent=1 // pred_fallthru
      _
    // Predicated region
    $region54: #{tpu_custom_call.1} parent=1 // pred_check
      _
    $region55: #{tpu_custom_call.1} parent=1 // pred_check_branch
      %94 = sbr.rel (0) target = $region57
    $region56: #{tpu_custom_call.1} parent=1 // pred_region
      %96 = dma.done [#allocation6], 32
    $region57: #{tpu_custom_call.1} parent=1 // pred_fallthru
      _
    // Predicated region
    $region58: #{tpu_custom_call.1} parent=1 // pred_check
      _
    $region59: #{tpu_custom_call.1} parent=1 // pred_check_branch
      %98 = sbr.rel (0) target = $region61
    $region60: #{tpu_custom_call.1} parent=1 // pred_region
      %100 = dma.done [#allocation9], 4096
    $region61: #{tpu_custom_call.1} parent=1 // pred_fallthru
      _
    %v102 = vld [vmem:[#allocation3] sm:$0xff]
    %v103 = vld [vmem:[#allocation3 + $0x8] sm:$0xff]
    %v104 = vpack.c.bf16 %v103, %v102
    %v105 = vld [vmem:[#allocation5] sm:$0xff]
    %v106 = vld [vmem:[#allocation5 + $0x8] sm:$0xff]
    %v107 = vld [vmem:[#allocation5 + $0x10] sm:$0xff]
    %v108 = vld [vmem:[#allocation5 + $0x18] sm:$0xff]
    %v109 = vld [vmem:[#allocation5 + $0x20] sm:$0xff]
    %v110 = vld [vmem:[#allocation5 + $0x28] sm:$0xff]
    %v111 = vld [vmem:[#allocation5 + $0x30] sm:$0xff]
    %v112 = vld [vmem:[#allocation5 + $0x38] sm:$0xff]
    %v113 = vpack.c.bf16 %v107, %v105
    %v114 = vpack.c.bf16 %v108, %v106
    %v115 = vpack.c.bf16 %v111, %v109
    %v116 = vpack.c.bf16 %v112, %v110
    %v117 = vld [vmem:[%s2] sm:$0x3]
    %v119 = vperm.slane %v117, 0
    %v120 = vperm.slane %v117, 1
    %vm123 = vcmask 261120
    %v125 = vsel %vm123, %v104, 0
    %127 = vmatpush.bf16.msra.mxu0 0
    %128 = vmatpush.bf16.msra.mxu0 0
    %129 = vmatpush.bf16.msra.mxu0 0
    %130 = vmatpush.bf16.msra.mxu0 0
    %131 = vmatpush.bf16.msra.mxu0 0
    %132 = vmatpush.bf16.msra.mxu0 0
    %133 = vmatpush.bf16.msra.mxu0 %v115
    %134 = vmatpush.bf16.msra.mxu0 %v113
    %135 = vmatmul.bf16.gmra.mxu0 %v125
    %v136 = vpop.f32.mrf.mxu0
    %v137 = vadd.f32 %v119, %v136
    %v138 = vpop.f32.mrf.mxu0
    %v139 = vadd.f32 %v119, %v138
    %140 = vdwg.mxu0
    %141 = vmatpush.bf16.msra.mxu0 0
    %142 = vmatpush.bf16.msra.mxu0 0
    %143 = vmatpush.bf16.msra.mxu0 0
    %144 = vmatpush.bf16.msra.mxu0 0
    %145 = vmatpush.bf16.msra.mxu0 0
    %146 = vmatpush.bf16.msra.mxu0 0
    %147 = vmatpush.bf16.msra.mxu0 %v116
    %148 = vmatpush.bf16.msra.mxu0 %v114
    %149 = vmatmul.bf16.gmra.mxu0 %v125
    %v150 = vpop.f32.mrf.mxu0
    %v151 = vadd.f32 %v120, %v150
    %v152 = vpop.f32.mrf.mxu0
    %v153 = vadd.f32 %v120, %v152
    %154 = vdwg.mxu0
    %v155 = vld [vmem:[%s3] sm:$0x3]
    %v156 = vld [vmem:[#allocation7] sm:$0x3]
    %v157 = vadd.f32 %v137, %v151
    %158 = vadd.xlane.f32.xlu0 %v157
    %v159 = vpop.xlane.xlu0 %158
    %v160 = vadd.f32 %v139, %v153
    %161 = vadd.xlane.f32.xlu0 %v160
    %v162 = vpop.xlane.xlu0 %161
    %v163 = vrcp.pop 256.0
    %v164 = vmul.f32 256.0, %v163
    %v165 = vsub.f32 1.0, %v164
    %v166 = vmul.f32 %v163, %v165
    %v167 = vadd.f32 %v163, %v166
    %vm168 = vweird.f32 %v163
    %v169 = vsel %vm168, %v163, %v167
    %v170 = vmul.f32 %v159, %v169
    %v171 = vmul.f32 %v162, %v169
    %v172 = vsub.f32 %v137, %v170
    %v173 = vsub.f32 %v151, %v170
    %v174 = vsub.f32 %v139, %v171
    %v175 = vsub.f32 %v153, %v171
    %v176 = vmul.f32 %v172, %v172
    %v177 = vmul.f32 %v173, %v173
    %v178 = vmul.f32 %v174, %v174
    %v179 = vmul.f32 %v175, %v175
    %v180 = vadd.f32 %v176, %v177
    %181 = vadd.xlane.f32.xlu0 %v180
    %v182 = vpop.xlane.xlu0 %181
    %v183 = vadd.f32 %v178, %v179
    %184 = vadd.xlane.f32.xlu0 %v183
    %v185 = vpop.xlane.xlu0 %184
    %v186 = vmul.f32 %v182, %v169
    %v187 = vmul.f32 %v185, %v169
    %v188 = vadd.f32 %v186, 1e-05
    %v189 = vadd.f32 %v187, 1e-05
    %v190 = vrsqrt.pop %v188
    %v191 = vmul.f32 %v190, %v188
    %v192 = vmul.f32 %v191, %v190
    %v193 = vmul.f32 0.5, %v192
    %v194 = vsub.f32 1.5, %v193
    %v195 = vmul.f32 %v190, %v194
    %vm196 = vweird.f32 %v188
    %vm197 = vweird.f32 %v190
    %vm198 = vmor %vm196, %vm197
    %v199 = vsel %vm198, %v190, %v195
    %v200 = vrsqrt.pop %v189
    %v201 = vmul.f32 %v200, %v189
    %v202 = vmul.f32 %v201, %v200
    %v203 = vmul.f32 0.5, %v202
    %v204 = vsub.f32 1.5, %v203
    %v205 = vmul.f32 %v200, %v204
    %vm206 = vweird.f32 %v189
    %vm207 = vweird.f32 %v200
    %vm208 = vmor %vm206, %vm207
    %v209 = vsel %vm208, %v200, %v205
    %v210 = vmul.f32 %v172, %v199
    %v211 = vmul.f32 %v173, %v199
    %v212 = vmul.f32 %v174, %v209
    %v213 = vmul.f32 %v175, %v209
    %v215 = vperm.slane %v155, 0
    %v216 = vperm.slane %v155, 1
    %v219 = vmul.f32 %v210, %v215
    %v220 = vmul.f32 %v211, %v216
    %v221 = vmul.f32 %v212, %v215
    %v222 = vmul.f32 %v213, %v216
    %v224 = vperm.slane %v156, 0
    %v225 = vperm.slane %v156, 1
    %v228 = vadd.f32 %v219, %v224
    %v229 = vadd.f32 %v220, %v225
    %v230 = vadd.f32 %v221, %v224
    %v231 = vadd.f32 %v222, %v225
    %vm232 = vcmp.gt.f32.partialorder %v228, 0.0
    %vm233 = vcmp.gt.f32.partialorder %v229, 0.0
    %vm234 = vcmp.gt.f32.partialorder %v230, 0.0
    %vm235 = vcmp.gt.f32.partialorder %v231, 0.0
    %v236 = vmul.f32 %v228, 0.01
    %v237 = vmul.f32 %v229, 0.01
    %v238 = vmul.f32 %v230, 0.01
    %v239 = vmul.f32 %v231, 0.01
    %v240 = vsel %vm232, %v228, %v236
    %v241 = vsel %vm233, %v229, %v237
    %v242 = vsel %vm234, %v230, %v238
    %v243 = vsel %vm235, %v231, %v239
    %v244 = vld [vmem:[#allocation8] sm:$0xff]
    %v245 = vld [vmem:[#allocation8 + $0x8] sm:$0xff]
    %v246 = vld [vmem:[#allocation8 + $0x10] sm:$0xff]
    %v247 = vld [vmem:[#allocation8 + $0x18] sm:$0xff]
    %v248 = vld [vmem:[#allocation8 + $0x20] sm:$0xff]
    %v249 = vld [vmem:[#allocation8 + $0x28] sm:$0xff]
    %v250 = vld [vmem:[#allocation8 + $0x30] sm:$0xff]
    %v251 = vld [vmem:[#allocation8 + $0x38] sm:$0xff]
    %v252 = vld [vmem:[#allocation8 + $0x40] sm:$0xff]
    %v253 = vld [vmem:[#allocation8 + $0x48] sm:$0xff]
    %v254 = vld [vmem:[#allocation8 + $0x50] sm:$0xff]
    %v255 = vld [vmem:[#allocation8 + $0x58] sm:$0xff]
    %v256 = vld [vmem:[#allocation8 + $0x60] sm:$0xff]
    %v257 = vld [vmem:[#allocation8 + $0x68] sm:$0xff]
    %v258 = vld [vmem:[#allocation8 + $0x70] sm:$0xff]
    %v259 = vld [vmem:[#allocation8 + $0x78] sm:$0xff]
    %v260 = vld [vmem:[#allocation8 + $0x80] sm:$0xff]
    %v261 = vld [vmem:[#allocation8 + $0x88] sm:$0xff]
    %v262 = vld [vmem:[#allocation8 + $0x90] sm:$0xff]
    %v263 = vld [vmem:[#allocation8 + $0x98] sm:$0xff]
    %v264 = vld [vmem:[#allocation8 + $0xa0] sm:$0xff]
    %v265 = vld [vmem:[#allocation8 + $0xa8] sm:$0xff]
    %v266 = vld [vmem:[#allocation8 + $0xb0] sm:$0xff]
    %v267 = vld [vmem:[#allocation8 + $0xb8] sm:$0xff]
    %v268 = vld [vmem:[#allocation8 + $0xc0] sm:$0xff]
    %v269 = vld [vmem:[#allocation8 + $0xc8] sm:$0xff]
    %v270 = vld [vmem:[#allocation8 + $0xd0] sm:$0xff]
    %v271 = vld [vmem:[#allocation8 + $0xd8] sm:$0xff]
    %v272 = vld [vmem:[#allocation8 + $0xe0] sm:$0xff]
    %v273 = vld [vmem:[#allocation8 + $0xe8] sm:$0xff]
    %v274 = vld [vmem:[#allocation8 + $0xf0] sm:$0xff]
    %v275 = vld [vmem:[#allocation8 + $0xf8] sm:$0xff]
    %v276 = vpack.c.bf16 %v245, %v244
    %v277 = vpack.c.bf16 %v247, %v246
    %v278 = vpack.c.bf16 %v249, %v248
    %v279 = vpack.c.bf16 %v251, %v250
    %v280 = vpack.c.bf16 %v253, %v252
    %v281 = vpack.c.bf16 %v255, %v254
    %v282 = vpack.c.bf16 %v257, %v256
    %v283 = vpack.c.bf16 %v259, %v258
    %v284 = vpack.c.bf16 %v261, %v260
    %v285 = vpack.c.bf16 %v263, %v262
    %v286 = vpack.c.bf16 %v265, %v264
    %v287 = vpack.c.bf16 %v267, %v266
    %v288 = vpack.c.bf16 %v269, %v268
    %v289 = vpack.c.bf16 %v271, %v270
    %v290 = vpack.c.bf16 %v273, %v272
    %v291 = vpack.c.bf16 %v275, %v274
    %v292 = vpack.c.bf16 %v242, %v240
    %v293 = vpack.c.bf16 %v243, %v241
    %v294 = vld [vmem:[%s6] sm:$0x1]
    %v296 = vperm.slane %v294, 0
    %298 = vmatpush.bf16.msra.mxu0 %v283
    %299 = vmatpush.bf16.msra.mxu0 %v282
    %300 = vmatpush.bf16.msra.mxu0 %v281
    %301 = vmatpush.bf16.msra.mxu0 %v280
    %302 = vmatpush.bf16.msra.mxu0 %v279
    %303 = vmatpush.bf16.msra.mxu0 %v278
    %304 = vmatpush.bf16.msra.mxu0 %v277
    %305 = vmatpush.bf16.msra.mxu0 %v276
    %306 = vmatmul.bf16.gmra.mxu0 %v292
    %v307 = vpop.f32.mrf.mxu0
    %v308 = vadd.f32 %v296, %v307
    %v309 = vpop.f32.mrf.mxu0
    %v310 = vadd.f32 %v296, %v309
    %311 = vdwg.mxu0
    %312 = vmatpush.bf16.msra.mxu0 %v291
    %313 = vmatpush.bf16.msra.mxu0 %v290
    %314 = vmatpush.bf16.msra.mxu0 %v289
    %315 = vmatpush.bf16.msra.mxu0 %v288
    %316 = vmatpush.bf16.msra.mxu0 %v287
    %317 = vmatpush.bf16.msra.mxu0 %v286
    %318 = vmatpush.bf16.msra.mxu0 %v285
    %319 = vmatpush.bf16.msra.mxu0 %v284
    %320 = vmatmul.bf16.gmra.mxu0 %v293
    %v321 = vpop.f32.mrf.mxu0
    %v322 = vadd.f32 %v308, %v321
    %v323 = vpop.f32.mrf.mxu0
    %v324 = vadd.f32 %v310, %v323
    %325 = vdwg.mxu0
    %v326 = vld [vmem:[%s7] sm:$0x1]
    %v327 = vld [vmem:[%s8] sm:$0x1]
    %328 = vadd.xlane.f32.xlu0 %v322
    %v329 = vpop.xlane.xlu0 %328
    %330 = vadd.xlane.f32.xlu0 %v324
    %v331 = vpop.xlane.xlu0 %330
    %v332 = vrcp.pop 128.0
    %v333 = vmul.f32 128.0, %v332
    %v334 = vsub.f32 1.0, %v333
    %v335 = vmul.f32 %v332, %v334
    %v336 = vadd.f32 %v332, %v335
    %vm337 = vweird.f32 %v332
    %v338 = vsel %vm337, %v332, %v336
    %v339 = vmul.f32 %v329, %v338
    %v340 = vmul.f32 %v331, %v338
    %v341 = vsub.f32 %v322, %v339
    %v342 = vsub.f32 %v324, %v340
    %v343 = vmul.f32 %v341, %v341
    %v344 = vmul.f32 %v342, %v342
    %345 = vadd.xlane.f32.xlu0 %v343
    %v346 = vpop.xlane.xlu0 %345
    %347 = vadd.xlane.f32.xlu0 %v344
    %v348 = vpop.xlane.xlu0 %347
    %v349 = vmul.f32 %v346, %v338
    %v350 = vmul.f32 %v348, %v338
    %v351 = vadd.f32 %v349, 1e-05
    %v352 = vadd.f32 %v350, 1e-05
    %v353 = vrsqrt.pop %v351
    %v354 = vmul.f32 %v353, %v351
    %v355 = vmul.f32 %v354, %v353
    %v356 = vmul.f32 0.5, %v355
    %v357 = vsub.f32 1.5, %v356
    %v358 = vmul.f32 %v353, %v357
    %vm359 = vweird.f32 %v351
    %vm360 = vweird.f32 %v353
    %vm361 = vmor %vm359, %vm360
    %v362 = vsel %vm361, %v353, %v358
    %v363 = vrsqrt.pop %v352
    %v364 = vmul.f32 %v363, %v352
    %v365 = vmul.f32 %v364, %v363
    %v366 = vmul.f32 0.5, %v365
    %v367 = vsub.f32 1.5, %v366
    %v368 = vmul.f32 %v363, %v367
    %vm369 = vweird.f32 %v352
    %vm370 = vweird.f32 %v363
    %vm371 = vmor %vm369, %vm370
    %v372 = vsel %vm371, %v363, %v368
    %v373 = vmul.f32 %v341, %v362
    %v374 = vmul.f32 %v342, %v372
    %v376 = vperm.slane %v326, 0
    %v378 = vmul.f32 %v373, %v376
    %v379 = vmul.f32 %v374, %v376
    %v381 = vperm.slane %v327, 0
    %v383 = vadd.f32 %v378, %v381
    %v384 = vadd.f32 %v379, %v381
    %vm385 = vcmp.gt.f32.partialorder %v383, 0.0
    %vm386 = vcmp.gt.f32.partialorder %v384, 0.0
    %v387 = vmul.f32 %v383, 0.01
    %v388 = vmul.f32 %v384, 0.01
    %v389 = vsel %vm385, %v383, %v387
    %v390 = vsel %vm386, %v384, %v388
    %v391 = vld [vmem:[%s9] sm:$0x1]
    %v393 = vperm.slane %v391, 0
    %v395 = vmul.f32 %v389, %v393
    %v396 = vmul.f32 %v390, %v393
    %397 = vadd.xlane.f32.xlu0 %v395
    %v398 = vpop.xlane.xlu0 %397
    %399 = vadd.xlane.f32.xlu0 %v396
    %v400 = vpop.xlane.xlu0 %399
    %v401 = vld [vmem:[#allocation2] sm:$0x1]
    %v403 = vperm.slane %v401, 0
    %v405 = vadd.f32 %v398, %v403
    %v406 = vadd.f32 %v400, %v403
    %vm407 = vcmask 7168
    %408 = vst.msk [vmem:[%s11] sm:$0xff] %vm407, %v405
    %409 = vst.msk [vmem:[%s11 + $0x8] sm:$0xff] %vm407, %v406
    // Predicated region
    $region62: #{tpu_custom_call.1} parent=1 // pred_check
      _
    $region63: #{tpu_custom_call.1} parent=1 // pred_check_branch
      %411 = sbr.rel (0) target = $region65
    $region64: #{tpu_custom_call.1} parent=1 // pred_region
      _
    $region65: #{tpu_custom_call.1} parent=1 // pred_fallthru
      _
    // Predicated region
    $region66: #{tpu_custom_call.1} parent=1 // pred_check
      _
    $region67: #{tpu_custom_call.1} parent=1 // pred_check_branch
      %413 = sbr.rel (0) target = $region69
    $region68: #{tpu_custom_call.1} parent=1 // pred_region
      _
    $region69: #{tpu_custom_call.1} parent=1 // pred_fallthru
      _
    %414 = vsyncpa [#allocation4], 1
    %415 = vsyncpa [#allocation6], 1
    %416 = vsyncpa [#allocation9], 1

</llo_original>
